<compile_context>
chip_gen: v7x
topology: tpu7x:2x2x1
jax: 0.10.0
libtpu: 0.0.40
codegen_flags: <defaults>
</compile_context>

<pallas_src>
import itertools

import numpy as np

import jax
import jax.numpy as jnp
from jax.experimental import pallas as pl
from jax.experimental.pallas import tpu as pltpu


# ----------------------------------------------------------------------------
# small helpers
# ----------------------------------------------------------------------------
def _round_up(x, m):
    return ((x + m - 1) // m) * m


def _device_kind():
    try:
        return jax.devices()[0].device_kind.lower()
    except Exception:
        return ""


def _default_vmem_limit():
    kind = _device_kind()
    if "v5" in kind or "v6" in kind:
        return 96 * 1024 * 1024      # 128 MiB physical VMEM -> plenty of headroom
    return 48 * 1024 * 1024          # v7x: 64 MiB physical per TC -> stay <= 48 MiB


def _preferred_lane_gran():
    # v6e / v7x MXU is 2x256x256 -> prefer 256-multiple tiles; v5e is 4x128x128.
    return 128 if "v5" in _device_kind() else 256


def _multi_core_chip():
    kind = _device_kind()
    return ("v7" in kind) or ("7x" in kind)


def _largest_divisor_tile(extent, gran, cap):
    """Largest t <= cap with t % gran == 0 and extent % t == 0 (0 if none)."""
    best = 0
    t = gran
    lim = min(extent, cap)
    while t <= lim:
        if extent % t == 0:
            best = t
        t += gran
    return best


def _pick_tile(extent, pref_gran, cap, base_gran):
    """Largest tile <= cap dividing `extent`, preferring pref_gran multiples."""
    t = _largest_divisor_tile(extent, pref_gran, cap)
    if t == 0 and pref_gran != base_gran:
        t = _largest_divisor_tile(extent, base_gran, cap)
    if t == 0:
        t = base_gran                # cap below the minimum legal tile
    return t


# ----------------------------------------------------------------------------
# Parameter-only helpers (faithful ports of the module's methods)
# ----------------------------------------------------------------------------
def _to_decard_idx(angle, size):
    # faithful port of Dendrite_layer.to_decard_idx
    a = jnp.arcsin(jnp.sin(angle))
    b = jnp.cos(angle)
    c = (1.0 - jnp.sin(angle) ** 2 + 1e-06) ** 0.5
    f = a * b / c
    f = 2.0 * f / jnp.pi
    f = f + 1.0
    f = f / 2.0
    f = f * (size - 1)
    return f


def _give_window(window_width, num_dim):
    d = [list(range(-window_width, window_width + 1)) for _ in range(num_dim)]
    return list(itertools.product(*d))


def build_dendrite_params(key, input_size, output_size, num_sinapse):
    """Deterministic init mirroring __init__ + reset_parameters."""
    kw, k0, k1 = jax.random.split(key, 3)
    S = num_sinapse
    Ho, Wo = output_size
    # nn.init.uniform_(synapses_weight, a=-1, b=1)
    weight = jax.random.uniform(kw, (S, Ho, Wo), jnp.float32, -1.0, 1.0)
    # synapses_coordinates: one tensor per input dim, torch.rand(...) * pi
    coord0 = jax.random.uniform(k0, (S, Ho, Wo), jnp.float32) * jnp.pi
    coord1 = jax.random.uniform(k1, (S, Ho, Wo), jnp.float32) * jnp.pi
    return weight, (coord0, coord1)


def build_index_and_coeff(weight, coords, input_size, output_size, window_width):
    """Parameter-only precompute of gather indices and weight*src coefficients."""
    H_in, W_in = input_size
    Ho, Wo = output_size
    deltas = _give_window(window_width, len(input_size))  # K = (2*ww+1)^2 tuples
    K = len(deltas)
    S = weight.shape[0]

    round_idx = []
    for d in range(2):
        per_delta = []
        for delta in deltas:
            delta_idx = coords[d] + jnp.pi * delta[d] / (input_size[d] - 1)
            dec = _to_decard_idx(delta_idx, input_size[d])
            per_delta.append(jnp.round(dec).astype(jnp.int32))
        round_idx.append(jnp.stack(per_delta, axis=-1))  # (S, Ho, Wo, K)

    # NOTE: the reference module reuses the stale loop variable `dim` (== last
    # input dim) when converting the *base* coordinate; reproduce that exactly.
    stale_size = input_size[-1]
    src = jnp.zeros((S, Ho, Wo, K), jnp.float32)
    for d in range(2):
        dec_base = _to_decard_idx(coords[d], stale_size)[..., None]  # (S,Ho,Wo,1)
        src = src + (round_idx[d].astype(jnp.float32) - dec_base) ** 2
    src = jnp.sqrt(src)
    src = 6.0 * (window_width - 2.0 * src) / window_width
    src = 1.0 / (1.0 + jnp.exp(-src))

    coeff = weight[..., None] * src                 # (S, Ho, Wo, K)
    flat_in = round_idx[0] * W_in + round_idx[1]    # (S, Ho, Wo, K) index into H_in*W_in
    # TODO(synk): jnp.round vs torch.round may differ on exact .5 ties when
    # building flat_in (parameter-setup fidelity only, not a kernel issue).
    return flat_in, coeff


# ----------------------------------------------------------------------------
# Pallas kernel: out[b_blk, q_tile] += sig[b_blk, k_tile] @ M[k_tile, q_tile]
# grid = (B blocks [parallel], Q tiles [parallel], K tiles [arbitrary, inner]).
# The f32 output block is resident in VMEM across K (its index_map ignores k)
# and doubles as the accumulator -- no scratch buffer needed.
# ----------------------------------------------------------------------------
def _dendrite_matmul_kernel(sig_ref, m_ref, out_ref):
    @pl.when(pl.program_id(2) == 0)
    def _():
        out_ref[...] = jnp.zeros_like(out_ref)

    out_ref[...] += jnp.dot(
        sig_ref[...], m_ref[...], preferred_element_type=jnp.float32
    )


def prepare_dendrite_forward(flat_in, coeff, input_size, output_size, *,
                             max_batch=16, vmem_limit_bytes=None):
    """One-time, parameter-only preparation (hoisted out of the forward).

    Compacts the contracted dimension to the N_used input cells actually
    referenced by the dendrites, builds & caches the padded bf16 scatter
    matrix, picks tiles, and constructs the pallas_call.
    """
    H_in, W_in = input_size
    Ho, Wo = output_size
    Q = Ho * Wo

    # ---- compact the contracted dim to the input cells actually used ------
    flat_np = np.asarray(jax.device_get(flat_in))
    used_np = np.unique(flat_np.ravel()).astype(np.int32)          # sorted
    N_used = int(used_np.size)
    remap = np.zeros(H_in * W_in, np.int32)
    remap[used_np] = np.arange(N_used, dtype=np.int32)
    rows_np = remap[flat_np]                                         # (S,Ho,Wo,K)
    q_np = np.broadcast_to(
        np.arange(Q, dtype=np.int32).reshape(1, Ho, Wo, 1), rows_np.shape)

    Mc = jnp.zeros((N_used, Q), jnp.float32)
    Mc = Mc.at[jnp.asarray(rows_np.ravel()), jnp.asarray(q_np.ravel())].add(
        coeff.ravel())

    # ---- lane/sublane-dense padded extents ---------------------------------
    if vmem_limit_bytes is None:
        vmem_limit_bytes = _default_vmem_limit()
    gran = _preferred_lane_gran()

    B_pad = _round_up(max(int(max_batch), 16), 16)   # bf16 packs 16 sublanes
    Q_pad = _round_up(Q, 128)                        # lane-dense output columns
    N_pad = _round_up(N_used, 128)

    # ---- tiles: divisors of the padded extents (no whole tiles of zeros) ---
    tb = _pick_tile(B_pad, 16, 256, 16)
    tq = _pick_tile(Q_pad, gran, 2048, 128)
    tk = _pick_tile(N_pad, gran, 2048, 128)

    # VMEM model: 2 bufs for signal + output blocks, up to 3 for M (Buffered(3)).
    def _vmem_bytes(tb_, tq_, tk_):
        return 2 * tb_ * tk_ * 2 + 3 * tk_ * tq_ * 2 + 2 * tb_ * tq_ * 4

    budget = int(0.8 * vmem_limit_bytes)
    while _vmem_bytes(tb, tq, tk) > budget and tb > 16:
        tb = _pick_tile(B_pad, 16, tb // 2, 16)
    while _vmem_bytes(tb, tq, tk) > budget and tq > 128:
        tq = _pick_tile(Q_pad, gran, tq // 2, 128)
    while _vmem_bytes(tb, tq, tk) > budget and tk > 128:
        tk = _pick_tile(N_pad, gran, tk // 2, 128)

    # v7x has 2 TensorCores: make the parallel axes give both work when possible.
    if _multi_core_chip() and (B_pad // tb) * (Q_pad // tq) < 2:
        if Q_pad // tq < 2 and Q_pad >= 2 * 128:
            tq = _pick_tile(Q_pad, gran, Q_pad // 2, 128)
        elif B_pad // tb < 2 and B_pad >= 2 * 16:
            tb = _pick_tile(B_pad, 16, B_pad // 2, 16)

    grid_b, grid_q, grid_k = B_pad // tb, Q_pad // tq, N_pad // tk
    grid = (grid_b, grid_q, grid_k)

    # ---- padded bf16 copy of M: built ONCE here, reused every forward ------
    # TODO(synk): 8-bit M (int8 on v6e / fp8-e4m3 on v7x with folded scales)
    # would halve the dominant HBM stream; needs its own error budget.
    Mp = jnp.zeros((N_pad, Q_pad), jnp.bfloat16)
    Mp = Mp.at[:N_used, :Q].set(Mc.astype(jnp.bfloat16))
    Mp = jax.block_until_ready(Mp)

    # ---- M BlockSpec: deepen pipelining when the inner K loop is long enough
    # for DMA issue latency to be exposed at tiny B.
    def _m_index_map(b, q, k):
        return (k, q)

    if grid_k >= 3:
        try:
            m_spec = pl.BlockSpec((tk, tq), _m_index_map,
                                  pipeline_mode=pl.Buffered(3))
        except TypeError:                       # fallback: default double-buffer
            m_spec = pl.BlockSpec((tk, tq), _m_index_map)
    else:
        m_spec = pl.BlockSpec((tk, tq), _m_index_map)

    cost = pl.CostEstimate(
        flops=2 * B_pad * N_pad * Q_pad,
        transcendentals=0,
        bytes_accessed=(grid_q * B_pad * N_pad * 2     # signal re-read per q tile
                        + grid_b * N_pad * Q_pad * 2   # M re-read per b block
                        + B_pad * Q_pad * 4),          # f32 output
    )

    call = pl.pallas_call(
        _dendrite_matmul_kernel,
        out_shape=jax.ShapeDtypeStruct((B_pad, Q_pad), jnp.float32),
        grid_spec=pltpu.PrefetchScalarGridSpec(
            num_scalar_prefetch=0,
            grid=grid,
            in_specs=[
                pl.BlockSpec((tb, tk), lambda b, q, k: (b, k)),
                m_spec,
            ],
            out_specs=pl.BlockSpec((tb, tq), lambda b, q, k: (b, q)),
        ),
        compiler_params=pltpu.CompilerParams(
            dimension_semantics=("parallel", "parallel", "arbitrary"),
            vmem_limit_bytes=int(vmem_limit_bytes),
        ),
        cost_estimate=cost,
    )

    return dict(
        call=call, Mp=Mp, used=jnp.asarray(used_np),
        N_used=N_used, N_pad=N_pad, Q=Q, Q_pad=Q_pad, B_pad=B_pad,
        output_size=(Ho, Wo),
    )


def dendrite_forward(signal, prep):
    """out[b, ho, wo] = sum_n signal_flat[b, n] * M[n, ho*Wo + wo] (MXU matmul).

    Per-call work is only: gather the used signal columns, pad/cast to bf16,
    launch the cached pallas_call, slice/reshape the result.
    """
    B = signal.shape[0]
    if B > prep["B_pad"]:
        raise ValueError(
            f"batch {B} exceeds prepared max_batch {prep['B_pad']}; "
            "re-run prepare_dendrite_forward with a larger max_batch")

    sig_used = jnp.take(signal.reshape(B, -1), prep["used"], axis=1)
    sig = jnp.zeros((prep["B_pad"], prep["N_pad"]), jnp.bfloat16)
    sig = sig.at[:B, :prep["N_used"]].set(sig_used.astype(jnp.bfloat16))

    out_flat = prep["call"](sig, prep["Mp"])

    Ho, Wo = prep["output_size"]
    return out_flat[:B, :prep["Q"]].reshape(B, Ho, Wo)


# ----------------------------------------------------------------------------
if __name__ == "__main__":
    # small, module-consistent shapes
    input_size = (16, 16)
    output_size = (8, 8)
    num_sinapse = 4
    window_width = 1
    B = 2

    key = jax.random.PRNGKey(0)
    kp, kx = jax.random.split(key)

    weight, coords = build_dendrite_params(kp, input_size, output_size, num_sinapse)
    flat_in, coeff = build_index_and_coeff(
        weight, coords, input_size, output_size, window_width
    )

    # one-time parameter-only preparation (compaction + padded bf16 M + tiling)
    prep = prepare_dendrite_forward(
        flat_in, coeff, input_size, output_size, max_batch=16
    )

    signal = jax.random.normal(kx, (B,) + input_size, jnp.float32)
    out = jax.block_until_ready(dendrite_forward(signal, prep))

    # pure-JAX f32 reference: direct gather form of Dendrite_layer.activation
    # (gather signal at dendrite coordinates, scale by weight*src, einsum 'ZABCX->ZBC')
    sig_flat = signal.reshape(B, -1)
    gathered = sig_flat[:, flat_in]                       # (B, S, Ho, Wo, K)
    ref = jnp.sum(gathered * coeff[None], axis=(1, 4))    # (B, Ho, Wo)

    assert out.shape == (B,) + output_size
    # bf16 operand streaming (f32 accumulation) -> loosened tolerance vs f32 ref.
    max_err = float(jnp.max(jnp.abs(out - ref)))
    assert jnp.allclose(out, ref, rtol=5e-2, atol=1e-1), max_err
    print("KERNEL_OK")
</pallas_src>

<mosaic_0001>
module attributes {stable_mosaic.version = 11 : i64} {
  func.func @_dendrite_matmul_kernel(%arg0: i32, %arg1: i32, %arg2: i32, %arg3: memref<16x256xbf16, #tpu.memory_space<vmem>>, %arg4: memref<256x128xbf16, #tpu.memory_space<vmem>>, %arg5: memref<16x128xf32, #tpu.memory_space<vmem>>) attributes {dimension_semantics = [#tpu.dimension_semantics<parallel>, #tpu.dimension_semantics<parallel>, #tpu.dimension_semantics<arbitrary>], iteration_bounds = array<i64: 1, 1, 1>, scalar_prefetch = 0 : i64, scratch_operands = 0 : i64, tpu.core_type = #tpu.core_type<tc>, window_params = [{transform_indices = @transform_0, window_bounds = array<i64: 16, 256>}, {transform_indices = @transform_1, window_bounds = array<i64: 256, 128>}, {transform_indices = @transform_2, window_bounds = array<i64: 16, 128>}]} {
    %c0_i32 = arith.constant 0 : i32
    %0 = arith.cmpi eq, %arg2, %c0_i32 : i32
    %1 = arith.extui %0 : i1 to i32
    %c0_i32_0 = arith.constant 0 : i32
    %2 = arith.cmpi ne, %1, %c0_i32_0 : i32
    scf.if %2 {
      %cst_8 = arith.constant 0.000000e+00 : f32
      %9 = vector.broadcast %cst_8 : f32 to vector<16x128xf32>
      %c0_9 = arith.constant 0 : index
      %c0_10 = arith.constant 0 : index
      %10 = vector.load %arg5[%c0_9, %c0_10] : memref<16x128xf32, #tpu.memory_space<vmem>>, vector<16x128xf32>
      tpu.vector_store %arg5[%c0_9, %c0_10], %9 {strides = array<i32>} : memref<16x128xf32, #tpu.memory_space<vmem>>, vector<16x128xf32>,
    } else {
    }
    %c0 = arith.constant 0 : index
    %c0_1 = arith.constant 0 : index
    %3 = vector.load %arg5[%c0, %c0_1] : memref<16x128xf32, #tpu.memory_space<vmem>>, vector<16x128xf32>
    %c0_2 = arith.constant 0 : index
    %c0_3 = arith.constant 0 : index
    %4 = vector.load %arg3[%c0_2, %c0_3] : memref<16x256xbf16, #tpu.memory_space<vmem>>, vector<16x256xbf16>
    %c0_4 = arith.constant 0 : index
    %c0_5 = arith.constant 0 : index
    %5 = vector.load %arg4[%c0_4, %c0_5] : memref<256x128xbf16, #tpu.memory_space<vmem>>, vector<256x128xbf16>
    %cst = arith.constant dense<0.000000e+00> : vector<16x128xf32>
    %6 = tpu.matmul %4, %5, %cst {dimension_numbers = #tpu.dot_dimension_numbers<[1], [0], [0], [1], [0, 0, 1, 1], [], []>} : vector<16x256xbf16>, vector<256x128xbf16>, vector<16x128xf32> -> vector<16x128xf32>
    %7 = arith.addf %3, %6 : vector<16x128xf32>
    %c0_6 = arith.constant 0 : index
    %c0_7 = arith.constant 0 : index
    %8 = vector.load %arg5[%c0_6, %c0_7] : memref<16x128xf32, #tpu.memory_space<vmem>>, vector<16x128xf32>
    tpu.vector_store %arg5[%c0_6, %c0_7], %7 {strides = array<i32>} : memref<16x128xf32, #tpu.memory_space<vmem>>, vector<16x128xf32>,
    return
  }
  func.func @transform_0(%arg0: i32, %arg1: i32, %arg2: i32) -> (i32, i32) {
    %c0_i32 = arith.constant 0 : i32
    return %arg0, %arg2 : i32, i32
  }
  func.func @transform_1(%arg0: i32, %arg1: i32, %arg2: i32) -> (i32, i32) {
    %c0_i32 = arith.constant 0 : i32
    return %arg2, %arg1 : i32, i32
  }
  func.func @transform_2(%arg0: i32, %arg1: i32, %arg2: i32) -> (i32, i32) {
    %c0_i32 = arith.constant 0 : i32
    return %arg0, %arg1 : i32, i32
  }
}

</mosaic_0001>

<llo_original>
// kernel: tpu_custom_call.1
$region0: #{tpu_custom_call.1}
  #allocation0 [shape = 'u32[]', space=smem, size = 0x4, offset = 0x4, fixed_abs, tag = 'smem constant byte address 0x4 - core index']
  #allocation1 [shape = 'u32[144,128]{1,0:T(1,128)}', space=vmem, size = 0x12000, scoped, tag = 'internal scratch']
  %s0 = inlined_call_operand.hbm [shape: bf16[16,256], index: 0, kind: input, shape index: {}]
  %s1 = inlined_call_operand.hbm [shape: bf16[256,128], index: 1, kind: input, shape index: {}]
  %s2 = inlined_call_operand.hbm [shape: f32[16,128], index: 2, kind: output, shape index: {}]
  %s3 = sld [smem:[#allocation0]]
  $region30: #{tpu_custom_call.1} parent=0
    _
  %s5 = ssub.s32 1, %s3
  %s6 = scalar_select 0, %s5, %s3
  $region1: #{tpu_custom_call.1} parent=0
    #allocation2 [shape = 'u8[8192]{0}', space=vmem, size = 0x2000, scoped, tag = 'input window, operand 0, single buffered']
    #allocation3 [shape = 's32[1]{0}', space=sflag, size = 0x4, scoped, tag = 'scoped memory for tpu_custom_call.1']
    #allocation4 [shape = 's32[1]{0}', space=sflag, size = 0x4, scoped, tag = 'scoped memory for tpu_custom_call.1']
    #allocation5 [shape = 'u8[65536]{0}', space=vmem, size = 0x10000, scoped, tag = 'input window, operand 1, single buffered']
    #allocation6 [shape = 's32[1]{0}', space=sflag, size = 0x4, scoped, tag = 'scoped memory for tpu_custom_call.1']
    #allocation7 [shape = 'u8[8192]{0}', space=vmem, size = 0x2000, scoped, tag = 'output window, operand 0, single buffered']
    %7 = vsyncpa [#allocation3], 0
    %8 = vsyncpa [#allocation6], 0
    %9 = vsyncpa [#allocation4], 0
    // Predicated region
    $region2: #{tpu_custom_call.1} parent=1 // pred_check
      _
    $region3: #{tpu_custom_call.1} parent=1 // pred_check_branch
      %11 = sbr.rel (0) target = $region5
    $region4: #{tpu_custom_call.1} parent=1 // pred_region
      %s13 = ssub.s32 256, 256
      %14 = vsyncadd [#allocation3], %s13
      %s15 = sshll.u32 [#allocation2], 4
      %s16 = int_to_ptr.vmem [resolvable:$true] %s15
      %21 = dma.hbm_to_vmem [thread:$0]  %s0, 256, %s16, [#allocation3], 128, 128, 8
    $region5: #{tpu_custom_call.1} parent=1 // pred_fallthru
      _
    // Predicated region
    $region6: #{tpu_custom_call.1} parent=1 // pred_check
      _
    $region7: #{tpu_custom_call.1} parent=1 // pred_check_branch
      %23 = sbr.rel (0) target = $region9
    $region8: #{tpu_custom_call.1} parent=1 // pred_region
      %s25 = ssub.s32 2048, 2048
      %26 = vsyncadd [#allocation6], %s25
      %s27 = sshll.u32 [#allocation5], 4
      %s28 = int_to_ptr.vmem [resolvable:$true] %s27
      %33 = dma.hbm_to_vmem [thread:$0]  %s1, 2048, %s28, [#allocation6], 64, 64, 4
    $region9: #{tpu_custom_call.1} parent=1 // pred_fallthru
      _
    // Predicated region
    $region10: #{tpu_custom_call.1} parent=1 // pred_check
      _
    $region11: #{tpu_custom_call.1} parent=1 // pred_check_branch
      %35 = sbr.rel (0) target = $region13
    $region12: #{tpu_custom_call.1} parent=1 // pred_region
      %36 = dma.done [#allocation3], 256
    $region13: #{tpu_custom_call.1} parent=1 // pred_fallthru
      _
    // Predicated region
    $region14: #{tpu_custom_call.1} parent=1 // pred_check
      _
    $region15: #{tpu_custom_call.1} parent=1 // pred_check_branch
      %38 = sbr.rel (0) target = $region17
    $region16: #{tpu_custom_call.1} parent=1 // pred_region
      %39 = dma.done [#allocation6], 2048
    $region17: #{tpu_custom_call.1} parent=1 // pred_fallthru
      _
    %p41 = scmp.eq.s32.totalorder 0, 0
    // Predicated region
    $region18: #{tpu_custom_call.1} parent=1 // pred_check
      %p42 = pneg %p41
    $region19: #{tpu_custom_call.1} parent=1 // pred_check_branch
      %44 = sbr.rel (%p42) target = $region21
    $region20: #{tpu_custom_call.1} parent=1 // pred_region
      %45 = vst [vmem:[#allocation7] sm:$0xff] 0.0
      %46 = vst [vmem:[#allocation7 + $0x8] sm:$0xff] 0.0
    $region21: #{tpu_custom_call.1} parent=1 // pred_fallthru
      _
    %v47 = vld [vmem:[#allocation7] sm:$0xff]
    %v48 = vld [vmem:[#allocation7 + $0x8] sm:$0xff]
    %v49 = vld [vmem:[#allocation2] sm:$0xff]
    %v50 = vld [vmem:[#allocation2 + $0x8] sm:$0xff]
    %v51 = vld [vmem:[#allocation5] sm:$0xf]
    %v52 = vld [vmem:[#allocation5 + $0x4] sm:$0xf]
    %v53 = vld [vmem:[#allocation5 + $0x8] sm:$0xf]
    %v54 = vld [vmem:[#allocation5 + $0xc] sm:$0xf]
    %v55 = vld [vmem:[#allocation5 + $0x10] sm:$0xf]
    %v56 = vld [vmem:[#allocation5 + $0x14] sm:$0xf]
    %v57 = vld [vmem:[#allocation5 + $0x18] sm:$0xf]
    %v58 = vld [vmem:[#allocation5 + $0x1c] sm:$0xf]
    %v59 = vld [vmem:[#allocation5 + $0x20] sm:$0xf]
    %v60 = vld [vmem:[#allocation5 + $0x24] sm:$0xf]
    %v61 = vld [vmem:[#allocation5 + $0x28] sm:$0xf]
    %v62 = vld [vmem:[#allocation5 + $0x2c] sm:$0xf]
    %v63 = vld [vmem:[#allocation5 + $0x30] sm:$0xf]
    %v64 = vld [vmem:[#allocation5 + $0x34] sm:$0xf]
    %v65 = vld [vmem:[#allocation5 + $0x38] sm:$0xf]
    %v66 = vld [vmem:[#allocation5 + $0x3c] sm:$0xf]
    %v67 = vld [vmem:[#allocation5 + $0x40] sm:$0xf]
    %v68 = vld [vmem:[#allocation5 + $0x44] sm:$0xf]
    %v69 = vld [vmem:[#allocation5 + $0x48] sm:$0xf]
    %v70 = vld [vmem:[#allocation5 + $0x4c] sm:$0xf]
    %v71 = vld [vmem:[#allocation5 + $0x50] sm:$0xf]
    %v72 = vld [vmem:[#allocation5 + $0x54] sm:$0xf]
    %v73 = vld [vmem:[#allocation5 + $0x58] sm:$0xf]
    %v74 = vld [vmem:[#allocation5 + $0x5c] sm:$0xf]
    %v75 = vld [vmem:[#allocation5 + $0x60] sm:$0xf]
    %v76 = vld [vmem:[#allocation5 + $0x64] sm:$0xf]
    %v77 = vld [vmem:[#allocation5 + $0x68] sm:$0xf]
    %v78 = vld [vmem:[#allocation5 + $0x6c] sm:$0xf]
    %v79 = vld [vmem:[#allocation5 + $0x70] sm:$0xf]
    %v80 = vld [vmem:[#allocation5 + $0x74] sm:$0xf]
    %v81 = vld [vmem:[#allocation5 + $0x78] sm:$0xf]
    %v82 = vld [vmem:[#allocation5 + $0x7c] sm:$0xf]
    %v85 = vunpack.c.l.b16 %v49
    %v86 = vunpack.c.h.b16 %v49
    %v87 = vunpack.c.l.b16 %v50
    %v88 = vunpack.c.h.b16 %v50
    %v89 = vpack.c.b16 %v87, %v85
    %v90 = vpack.c.b16 %v88, %v86
    %v125 = vunpack.c.l.b16 %v51
    %v126 = vunpack.c.l.b16 %v52
    %v127 = vunpack.c.l.b16 %v53
    %v128 = vunpack.c.l.b16 %v54
    %v129 = vunpack.c.l.b16 %v55
    %v130 = vunpack.c.l.b16 %v56
    %v131 = vunpack.c.l.b16 %v57
    %v132 = vunpack.c.l.b16 %v58
    %v133 = vunpack.c.l.b16 %v59
    %v134 = vunpack.c.l.b16 %v60
    %v135 = vunpack.c.l.b16 %v61
    %v136 = vunpack.c.l.b16 %v62
    %v137 = vunpack.c.l.b16 %v63
    %v138 = vunpack.c.l.b16 %v64
    %v139 = vunpack.c.l.b16 %v65
    %v140 = vunpack.c.l.b16 %v66
    %v141 = vunpack.c.l.b16 %v67
    %v142 = vunpack.c.l.b16 %v68
    %v143 = vunpack.c.l.b16 %v69
    %v144 = vunpack.c.l.b16 %v70
    %v145 = vunpack.c.l.b16 %v71
    %v146 = vunpack.c.l.b16 %v72
    %v147 = vunpack.c.l.b16 %v73
    %v148 = vunpack.c.l.b16 %v74
    %v149 = vunpack.c.l.b16 %v75
    %v150 = vunpack.c.l.b16 %v76
    %v151 = vunpack.c.l.b16 %v77
    %v152 = vunpack.c.l.b16 %v78
    %v153 = vunpack.c.l.b16 %v79
    %v154 = vunpack.c.l.b16 %v80
    %v155 = vunpack.c.l.b16 %v81
    %v156 = vunpack.c.l.b16 %v82
    %v157 = vpack.c.b16 %v126, %v125
    %v158 = vpack.c.b16 %v128, %v127
    %v159 = vpack.c.b16 %v130, %v129
    %v160 = vpack.c.b16 %v132, %v131
    %v161 = vpack.c.b16 %v134, %v133
    %v162 = vpack.c.b16 %v136, %v135
    %v163 = vpack.c.b16 %v138, %v137
    %v164 = vpack.c.b16 %v140, %v139
    %v165 = vpack.c.b16 %v142, %v141
    %v166 = vpack.c.b16 %v144, %v143
    %v167 = vpack.c.b16 %v146, %v145
    %v168 = vpack.c.b16 %v148, %v147
    %v169 = vpack.c.b16 %v150, %v149
    %v170 = vpack.c.b16 %v152, %v151
    %v171 = vpack.c.b16 %v154, %v153
    %v172 = vpack.c.b16 %v156, %v155
    %189 = vmatprep.subr.bf16.mxu0 0
    %190 = vmatpush1.bf16.msra.mxu0 %v157
    %191 = vmatprep.subr.bf16.mxu0 0
    %192 = vmatpush1.bf16.msra.mxu0 %v158
    %193 = vmatprep.subr.bf16.mxu0 0
    %194 = vmatpush1.bf16.msra.mxu0 %v159
    %195 = vmatprep.subr.bf16.mxu0 0
    %196 = vmatpush1.bf16.msra.mxu0 %v160
    %197 = vmatprep.subr.bf16.mxu0 0
    %198 = vmatpush1.bf16.msra.mxu0 %v161
    %199 = vmatprep.subr.bf16.mxu0 0
    %200 = vmatpush1.bf16.msra.mxu0 %v162
    %201 = vmatprep.subr.bf16.mxu0 0
    %202 = vmatpush1.bf16.msra.mxu0 %v163
    %203 = vmatprep.subr.bf16.mxu0 0
    %204 = vmatpush1.bf16.msra.mxu0 %v164
    %205 = vmatprep.subr.bf16.mxu0 0
    %206 = vmatpush1.bf16.msra.mxu0 %v165
    %207 = vmatprep.subr.bf16.mxu0 0
    %208 = vmatpush1.bf16.msra.mxu0 %v166
    %209 = vmatprep.subr.bf16.mxu0 0
    %210 = vmatpush1.bf16.msra.mxu0 %v167
    %211 = vmatprep.subr.bf16.mxu0 0
    %212 = vmatpush1.bf16.msra.mxu0 %v168
    %213 = vmatprep.subr.bf16.mxu0 0
    %214 = vmatpush1.bf16.msra.mxu0 %v169
    %215 = vmatprep.subr.bf16.mxu0 0
    %216 = vmatpush1.bf16.msra.mxu0 %v170
    %217 = vmatprep.subr.bf16.mxu0 0
    %218 = vmatpush1.bf16.msra.mxu0 %v171
    %219 = vmatprep.subr.bf16.mxu0 0
    %220 = vmatpush1.bf16.msra.mxu0 %v172
    %221 = vmatprep.mubr.bf16.mxu0 %v90
    %222 = vmatmul.mubr.bf16.gmra.mrb[0].mxu0 %v89
    %v223 = vpop.f32.mrb[0].mxu0
    %v224 = vadd.f32 0.0, %v223
    %v225 = vpop.f32.mrb[0].mxu0
    %v226 = vpop.f32.mrb[0].mxu0
    %v227 = vadd.f32 0.0, %v226
    %v228 = vpop.f32.mrb[0].mxu0
    %229 = vdwg.mxu0
    %v230 = vadd.f32 %v47, %v224
    %v231 = vadd.f32 %v48, %v227
    %232 = vst [vmem:[#allocation7] sm:$0xff] %v230
    %233 = vst [vmem:[#allocation7 + $0x8] sm:$0xff] %v231
    // Predicated region
    $region22: #{tpu_custom_call.1} parent=1 // pred_check
      _
    $region23: #{tpu_custom_call.1} parent=1 // pred_check_branch
      %235 = sbr.rel (0) target = $region25
    $region24: #{tpu_custom_call.1} parent=1 // pred_region
      %s237 = ssub.s32 256, 256
      %238 = vsyncadd [#allocation4], %s237
      %s239 = sshll.u32 [#allocation7], 4
      %s240 = int_to_ptr.vmem [resolvable:$true] %s239
      %245 = dma.vmem_to_hbm [thread:$0]  %s240, 256, %s2, [#allocation4], 128, 128, 8
    $region25: #{tpu_custom_call.1} parent=1 // pred_fallthru
      _
    // Predicated region
    $region26: #{tpu_custom_call.1} parent=1 // pred_check
      _
    $region27: #{tpu_custom_call.1} parent=1 // pred_check_branch
      %247 = sbr.rel (0) target = $region29
    $region28: #{tpu_custom_call.1} parent=1 // pred_region
      %248 = dma.done [#allocation4], 256
    $region29: #{tpu_custom_call.1} parent=1 // pred_fallthru
      _
    %249 = vsyncpa [#allocation3], 1
    %250 = vsyncpa [#allocation6], 1
    %251 = vsyncpa [#allocation4], 1

</llo_original>
